<compile_context>
chip_gen: v7x
topology: tpu7x:2x2x1
jax: 0.10.0
libtpu: 0.0.40
codegen_flags: <defaults>
</compile_context>

<pallas_src>
import functools
import math

import numpy as np
import jax
import jax.numpy as jnp
from jax.experimental import pallas as pl
from jax.experimental.pallas import tpu as pltpu

EPS_FFT = 1.1920929e-07   # torch.finfo(torch.float32).eps (kaldi epsilon)
CMVN_EPS = 1e-10          # CMVN module eps
PREEMPH = 0.97            # kaldi default preemphasis coefficient


# ----------------------------- Pallas kernel --------------------------------
def _spectrogram_cmvn_kernel(wav_ref, blo_ref, bhi_ref, mask0_ref, maskv_ref,
                             out_ref):
    """One clip per grid step.
       wav_ref:   [F+1, S]  waveform reshaped into frame-shift rows (f32)
       blo_ref:   [S, 2*Dp] window+preemphasis-folded DFT basis, rows 0..S-1
       bhi_ref:   [S, 2*Dp] same basis, rows S..L-1
       mask0_ref: [1, Dp]   1.0 at lane 0, else 0      (bin-0 = raw energy)
       maskv_ref: [1, Dp]   1.0 at lanes < D, else 0   (zero the lane padding)
       out_ref:   [F, Dp]   CMVN-normalized log-spectrogram, lane padded to Dp
    """
    F, Dp = out_ref.shape
    S = wav_ref.shape[1]
    L = 2 * S

    # in-kernel framing (50% overlap, L == 2*S): frame f = [row f | row f+1]
    a = wav_ref[pl.ds(0, F), :]                      # [F, S] aligned
    b = wav_ref[pl.ds(1, F), :]                      # [F, S] (1-sublane offset)

    # remove DC offset per frame
    m = (jnp.sum(a, axis=-1, keepdims=True)
         + jnp.sum(b, axis=-1, keepdims=True)) * (1.0 / L)       # [F, 1]
    xa = a - m
    xb = b - m

    # raw log-energy (before preemphasis / window), kaldi raw_energy=True
    log_energy = jnp.log(jnp.maximum(
        jnp.sum(xa * xa, axis=-1, keepdims=True)
        + jnp.sum(xb * xb, axis=-1, keepdims=True), EPS_FFT))    # [F, 1]

    # pre-emphasis + povey window + DFT, all folded into the basis:
    # two lane-dense MXU matmuls on sublane-aligned operands.
    proj = (jnp.dot(xa, blo_ref[...], preferred_element_type=jnp.float32)
            + jnp.dot(xb, bhi_ref[...], preferred_element_type=jnp.float32))
    re = proj[:, :Dp]
    im = proj[:, Dp:]
    spec = jnp.log(jnp.maximum(re * re + im * im, EPS_FFT))      # [F, Dp]

    # kaldi spectrogram: bin 0 holds the raw log-energy
    spec = spec + mask0_ref[...] * (log_energy - spec)

    # CMVN over time (dim 0); torch.std is unbiased (ddof=1).
    mean = jnp.mean(spec, axis=0, keepdims=True)
    centered = spec - mean
    var = jnp.sum(centered * centered, axis=0, keepdims=True) * (1.0 / (F - 1))
    inv_std = pl.reciprocal(CMVN_EPS + jnp.sqrt(var), approx=False)  # [1, Dp]
    # row-level scale * valid-bin mask, then one VPU tile multiply;
    # padded bins D..127 become exactly 0.0.
    out_ref[...] = centered * (inv_std * maskv_ref[...])


# --------------------- cached host-side constants (glue) ---------------------
@functools.lru_cache(maxsize=8)
def _make_constants(L, N, D, Dp):
    S = L // 2
    n = np.arange(L, dtype=np.float64)
    window = (0.5 - 0.5 * np.cos(2.0 * np.pi * n / (L - 1))) ** 0.85   # povey
    k = np.arange(D, dtype=np.float64)[None, :]
    ang = 2.0 * np.pi * n[:, None] * k / float(N)
    basis = np.zeros((L, 2 * Dp), dtype=np.float64)
    basis[:, :D] = np.cos(ang) * window[:, None]                 # window folded
    basis[:, Dp:Dp + D] = np.sin(ang) * window[:, None]
    # Fold pre-emphasis y[n] = x[n] - c*x[n-1] (replicate pad) into the basis:
    #   y @ B == x @ (B - c*B_up) - c*x[0]*B[0]; povey window[0] == 0 so the
    #   correction term is exactly zero.
    basis_pe = basis.copy()
    basis_pe[:-1, :] -= PREEMPH * basis[1:, :]
    blo = jnp.asarray(basis_pe[:S].astype(np.float32))           # [S, 2*Dp]
    bhi = jnp.asarray(basis_pe[S:].astype(np.float32))           # [S, 2*Dp]
    mask0 = np.zeros((1, Dp), dtype=np.float32); mask0[0, 0] = 1.0
    maskv = np.zeros((1, Dp), dtype=np.float32); maskv[0, :D] = 1.0
    return blo, bhi, jnp.asarray(mask0), jnp.asarray(maskv)


# ------------------------------- wrapper -------------------------------------
def feature_extractor(waveform, *, sample_rate=16000,
                      frame_length_ms=8.0, frame_shift_ms=4.0, trim=False):
    """Batched kaldi spectrogram + CMVN.

    waveform: [T], [1, T] or [B, T] float32.
    Returns (features, D):
      features: [B, F, 128] lane-dense, CMVN-normalized; bins D..127 are 0.0.
                (canonical layout; pass trim=True for the exact [B, F, D] view)
      D:        number of valid spectrogram bins.
    """
    wav = jnp.asarray(waveform, dtype=jnp.float32)
    if wav.ndim == 1:
        wav = wav[None, :]
    assert wav.ndim == 2, "expected waveform of shape [T], [1,T] or [B,T]"
    B, T = wav.shape

    L = int(sample_rate * frame_length_ms * 0.001)   # samples per frame
    S = int(sample_rate * frame_shift_ms * 0.001)    # frame shift
    # TODO(synk): in-kernel framing assumes frame_length == 2*frame_shift
    # (the kaldi 50% overlap used here); other ratios need a gather path.
    assert L == 2 * S, "in-kernel framing requires frame_length == 2*frame_shift"
    assert T >= L, "waveform shorter than one frame"
    F = 1 + (T - L) // S                             # snip_edges=True
    assert F >= 2, "CMVN (unbiased std) needs at least 2 frames"
    N = 1 << (L - 1).bit_length()                    # padded window (pow2)
    D = N // 2 + 1                                   # kaldi spectrogram bins
    Dp = max(128, -(-D // 128) * 128)                # lane-dense padded width

    blo, bhi, mask0, maskv = _make_constants(L, N, D, Dp)
    wav3 = wav[:, :(F + 1) * S].reshape(B, F + 1, S)  # shift-major, no gather

    feats = pl.pallas_call(
        _spectrogram_cmvn_kernel,
        out_shape=jax.ShapeDtypeStruct((B, F, Dp), jnp.float32),
        grid=(B,),
        in_specs=[
            pl.BlockSpec((None, F + 1, S), lambda b: (b, 0, 0)),  # per-clip wav
            pl.BlockSpec((S, 2 * Dp), lambda b: (0, 0)),          # VMEM-resident
            pl.BlockSpec((S, 2 * Dp), lambda b: (0, 0)),          # constants
            pl.BlockSpec((1, Dp), lambda b: (0, 0)),
            pl.BlockSpec((1, Dp), lambda b: (0, 0)),
        ],
        out_specs=pl.BlockSpec((None, F, Dp), lambda b: (b, 0, 0)),
        compiler_params=pltpu.CompilerParams(
            dimension_semantics=("parallel",)),       # v7x: shard clips over TCs
    )(wav3, blo, bhi, mask0, maskv)

    if trim:
        return feats[:, :, :D], D                     # optional exact kaldi view
    return feats, D                                   # canonical padded layout


# ------------------------- pure-JAX reference --------------------------------
def feature_extractor_ref(waveform, *, sample_rate=16000,
                          frame_length_ms=8.0, frame_shift_ms=4.0):
    wav = waveform.reshape(-1).astype(jnp.float32)
    T = wav.shape[0]
    L = int(sample_rate * frame_length_ms * 0.001)
    S = int(sample_rate * frame_shift_ms * 0.001)
    F = 1 + (T - L) // S
    N = 1 << (L - 1).bit_length()
    D = N // 2 + 1

    idx = jnp.arange(F)[:, None] * S + jnp.arange(L)[None, :]
    frames = wav[idx]                                            # [F, L]
    x = frames - jnp.mean(frames, axis=-1, keepdims=True)
    log_energy = jnp.log(jnp.maximum(jnp.sum(x * x, axis=-1, keepdims=True), EPS_FFT))
    prev = jnp.concatenate([x[:, :1], x[:, :-1]], axis=1)
    x = x - PREEMPH * prev
    n = jnp.arange(L, dtype=jnp.float32)
    window = (0.5 - 0.5 * jnp.cos(2.0 * math.pi * n / (L - 1))) ** 0.85
    x = x * window[None, :]
    k = jnp.arange(D, dtype=jnp.float32)[None, :]
    nn = jnp.arange(L, dtype=jnp.float32)[:, None]
    ang = 2.0 * math.pi * nn * k / float(N)
    re = x @ jnp.cos(ang)
    im = x @ jnp.sin(ang)
    spec = jnp.log(jnp.maximum(re * re + im * im, EPS_FFT))
    spec = spec.at[:, 0].set(log_energy[:, 0])
    mean = jnp.mean(spec, axis=0, keepdims=True)
    centered = spec - mean
    std = jnp.sqrt(jnp.sum(centered * centered, axis=0, keepdims=True) / (F - 1))
    return centered / (CMVN_EPS + std)


# --------------------------------- main ---------------------------------------
if __name__ == "__main__":
    key = jax.random.PRNGKey(0)
    # [B, T] batch of waveforms, T = 2048 samples per clip
    B, T = 4, 2048
    waveform = jax.random.normal(key, (B, T), dtype=jnp.float32)

    feats, D = feature_extractor(waveform)           # [B, F, 128] padded
    feats = jax.block_until_ready(feats)

    ref = jnp.stack([feature_extractor_ref(waveform[i]) for i in range(B)])

    assert feats.shape[0] == ref.shape[0] and feats.shape[1] == ref.shape[1], (
        feats.shape, ref.shape)
    out = feats[:, :, :D]                            # test-only comparison view
    max_err = float(jnp.max(jnp.abs(out - ref)))
    pad_max = float(jnp.max(jnp.abs(feats[:, :, D:])))
    if not bool(jnp.allclose(out, ref, atol=5e-2, rtol=5e-2)):
        raise SystemExit(f"kernel/reference mismatch, max_err={max_err}")
    if pad_max != 0.0:
        raise SystemExit(f"padded bins not zero, pad_max={pad_max}")

    print("KERNEL_OK")
</pallas_src>

<mosaic_0001>
module attributes {stable_mosaic.version = 11 : i64} {
  func.func @_spectrogram_cmvn_kernel(%arg0: i32, %arg1: memref<1x32x64xf32, #tpu.memory_space<vmem>>, %arg2: memref<64x256xf32, #tpu.memory_space<vmem>>, %arg3: memref<64x256xf32, #tpu.memory_space<vmem>>, %arg4: memref<1x128xf32, #tpu.memory_space<vmem>>, %arg5: memref<1x128xf32, #tpu.memory_space<vmem>>, %arg6: memref<1x31x128xf32, #tpu.memory_space<vmem>>) attributes {dimension_semantics = [#tpu.dimension_semantics<parallel>], iteration_bounds = array<i64: 4>, scalar_prefetch = 0 : i64, scratch_operands = 0 : i64, tpu.core_type = #tpu.core_type<tc>, window_params = [{transform_indices = @transform_0, window_bounds = array<i64: 1, 32, 64>}, {pipeline_mode = #tpu.pipeline_mode<synchronous>, transform_indices = @transform_1, window_bounds = array<i64: 64, 256>}, {pipeline_mode = #tpu.pipeline_mode<synchronous>, transform_indices = @transform_2, window_bounds = array<i64: 64, 256>}, {pipeline_mode = #tpu.pipeline_mode<synchronous>, transform_indices = @transform_3, window_bounds = array<i64: 1, 128>}, {pipeline_mode = #tpu.pipeline_mode<synchronous>, transform_indices = @transform_4, window_bounds = array<i64: 1, 128>}, {transform_indices = @transform_5, window_bounds = array<i64: 1, 31, 128>}]} {
    %c0 = arith.constant 0 : index
    %c0_0 = arith.constant 0 : index
    %c0_1 = arith.constant 0 : index
    %0 = vector.load %arg1[%c0, %c0_0, %c0_1] : memref<1x32x64xf32, #tpu.memory_space<vmem>>, vector<1x31x64xf32>
    %1 = vector.shape_cast %0 : vector<1x31x64xf32> to vector<31x64xf32>
    %c0_2 = arith.constant 0 : index
    %c1 = arith.constant 1 : index
    %c0_3 = arith.constant 0 : index
    %2 = vector.load %arg1[%c0_2, %c1, %c0_3] : memref<1x32x64xf32, #tpu.memory_space<vmem>>, vector<1x31x64xf32>
    %3 = vector.shape_cast %2 : vector<1x31x64xf32> to vector<31x64xf32>
    %cst = arith.constant dense<0.000000e+00> : vector<31xf32>
    %4 = vector.multi_reduction <add>, %1, %cst [1] : vector<31x64xf32> to vector<31xf32>
    %5 = vector.shape_cast %4 : vector<31xf32> to vector<31x1xf32>
    %cst_4 = arith.constant dense<0.000000e+00> : vector<31xf32>
    %6 = vector.multi_reduction <add>, %3, %cst_4 [1] : vector<31x64xf32> to vector<31xf32>
    %7 = vector.shape_cast %6 : vector<31xf32> to vector<31x1xf32>
    %8 = arith.addf %5, %7 : vector<31x1xf32>
    %cst_5 = arith.constant 7.812500e-03 : f32
    %9 = vector.broadcast %cst_5 : f32 to vector<31x1xf32>
    %10 = arith.mulf %8, %9 : vector<31x1xf32>
    %11 = vector.broadcast %10 : vector<31x1xf32> to vector<31x64xf32>
    %12 = arith.subf %1, %11 : vector<31x64xf32>
    %13 = vector.broadcast %10 : vector<31x1xf32> to vector<31x64xf32>
    %14 = arith.subf %3, %13 : vector<31x64xf32>
    %15 = arith.mulf %12, %12 : vector<31x64xf32>
    %cst_6 = arith.constant dense<0.000000e+00> : vector<31xf32>
    %16 = vector.multi_reduction <add>, %15, %cst_6 [1] : vector<31x64xf32> to vector<31xf32>
    %17 = vector.shape_cast %16 : vector<31xf32> to vector<31x1xf32>
    %18 = arith.mulf %14, %14 : vector<31x64xf32>
    %cst_7 = arith.constant dense<0.000000e+00> : vector<31xf32>
    %19 = vector.multi_reduction <add>, %18, %cst_7 [1] : vector<31x64xf32> to vector<31xf32>
    %20 = vector.shape_cast %19 : vector<31xf32> to vector<31x1xf32>
    %21 = arith.addf %17, %20 : vector<31x1xf32>
    %cst_8 = arith.constant 1.1920929E-7 : f32
    %22 = vector.broadcast %cst_8 : f32 to vector<31x1xf32>
    %23 = arith.maximumf %21, %22 : vector<31x1xf32>
    %24 = math.log %23 : vector<31x1xf32>
    %c0_9 = arith.constant 0 : index
    %c0_10 = arith.constant 0 : index
    %25 = vector.load %arg2[%c0_9, %c0_10] : memref<64x256xf32, #tpu.memory_space<vmem>>, vector<64x256xf32>
    %cst_11 = arith.constant dense<0.000000e+00> : vector<31x256xf32>
    %26 = tpu.matmul %12, %25, %cst_11 {dimension_numbers = #tpu.dot_dimension_numbers<[1], [0], [0], [1], [0, 0, 1, 1], [], []>} : vector<31x64xf32>, vector<64x256xf32>, vector<31x256xf32> -> vector<31x256xf32>
    %c0_12 = arith.constant 0 : index
    %c0_13 = arith.constant 0 : index
    %27 = vector.load %arg3[%c0_12, %c0_13] : memref<64x256xf32, #tpu.memory_space<vmem>>, vector<64x256xf32>
    %cst_14 = arith.constant dense<0.000000e+00> : vector<31x256xf32>
    %28 = tpu.matmul %14, %27, %cst_14 {dimension_numbers = #tpu.dot_dimension_numbers<[1], [0], [0], [1], [0, 0, 1, 1], [], []>} : vector<31x64xf32>, vector<64x256xf32>, vector<31x256xf32> -> vector<31x256xf32>
    %29 = arith.addf %26, %28 : vector<31x256xf32>
    %30 = vector.extract_strided_slice %29 {offsets = [0, 0], sizes = [31, 128], strides = [1, 1]} : vector<31x256xf32> to vector<31x128xf32>
    %31 = vector.extract_strided_slice %29 {offsets = [0, 128], sizes = [31, 128], strides = [1, 1]} : vector<31x256xf32> to vector<31x128xf32>
    %32 = arith.mulf %30, %30 : vector<31x128xf32>
    %33 = arith.mulf %31, %31 : vector<31x128xf32>
    %34 = arith.addf %32, %33 : vector<31x128xf32>
    %cst_15 = arith.constant 1.1920929E-7 : f32
    %35 = vector.broadcast %cst_15 : f32 to vector<31x128xf32>
    %36 = arith.maximumf %34, %35 : vector<31x128xf32>
    %37 = math.log %36 : vector<31x128xf32>
    %c0_16 = arith.constant 0 : index
    %c0_17 = arith.constant 0 : index
    %38 = vector.load %arg4[%c0_16, %c0_17] : memref<1x128xf32, #tpu.memory_space<vmem>>, vector<1x128xf32>
    %39 = vector.broadcast %24 : vector<31x1xf32> to vector<31x128xf32>
    %40 = arith.subf %39, %37 : vector<31x128xf32>
    %41 = vector.broadcast %38 : vector<1x128xf32> to vector<31x128xf32>
    %42 = arith.mulf %41, %40 : vector<31x128xf32>
    %43 = arith.addf %37, %42 : vector<31x128xf32>
    %cst_18 = arith.constant dense<0.000000e+00> : vector<128xf32>
    %44 = vector.multi_reduction <add>, %43, %cst_18 [0] : vector<31x128xf32> to vector<128xf32>
    %45 = vector.shape_cast %44 : vector<128xf32> to vector<1x128xf32>
    %cst_19 = arith.constant 3.100000e+01 : f32
    %46 = vector.broadcast %cst_19 : f32 to vector<1x128xf32>
    %47 = arith.divf %45, %46 : vector<1x128xf32>
    %48 = vector.broadcast %47 : vector<1x128xf32> to vector<31x128xf32>
    %49 = arith.subf %43, %48 : vector<31x128xf32>
    %50 = arith.mulf %49, %49 : vector<31x128xf32>
    %cst_20 = arith.constant dense<0.000000e+00> : vector<128xf32>
    %51 = vector.multi_reduction <add>, %50, %cst_20 [0] : vector<31x128xf32> to vector<128xf32>
    %52 = vector.shape_cast %51 : vector<128xf32> to vector<1x128xf32>
    %cst_21 = arith.constant 0.0333333351 : f32
    %53 = vector.broadcast %cst_21 : f32 to vector<1x128xf32>
    %54 = arith.mulf %52, %53 : vector<1x128xf32>
    %55 = math.sqrt %54 : vector<1x128xf32>
    %cst_22 = arith.constant 1.000000e-10 : f32
    %56 = vector.broadcast %cst_22 : f32 to vector<1x128xf32>
    %57 = arith.addf %56, %55 : vector<1x128xf32>
    %58 = tpu.reciprocal %57 : vector<1x128xf32> -> vector<1x128xf32>
    %c0_23 = arith.constant 0 : index
    %c0_24 = arith.constant 0 : index
    %59 = vector.load %arg5[%c0_23, %c0_24] : memref<1x128xf32, #tpu.memory_space<vmem>>, vector<1x128xf32>
    %60 = arith.mulf %58, %59 : vector<1x128xf32>
    %61 = vector.broadcast %60 : vector<1x128xf32> to vector<31x128xf32>
    %62 = arith.mulf %49, %61 : vector<31x128xf32>
    %c0_25 = arith.constant 0 : index
    %c0_26 = arith.constant 0 : index
    %c0_27 = arith.constant 0 : index
    %63 = vector.load %arg6[%c0_25, %c0_26, %c0_27] : memref<1x31x128xf32, #tpu.memory_space<vmem>>, vector<1x31x128xf32>
    %64 = vector.shape_cast %63 : vector<1x31x128xf32> to vector<31x128xf32>
    %65 = vector.shape_cast %62 : vector<31x128xf32> to vector<1x31x128xf32>
    tpu.vector_store %arg6[%c0_25, %c0_26, %c0_27], %65 {strides = array<i32>} : memref<1x31x128xf32, #tpu.memory_space<vmem>>, vector<1x31x128xf32>,
    return
  }
  func.func @transform_0(%arg0: i32) -> (i32, i32, i32) {
    %c0_i32 = arith.constant 0 : i32
    %c0_i32_0 = arith.constant 0 : i32
    %c0_i32_1 = arith.constant 0 : i32
    return %arg0, %c0_i32, %c0_i32_0 : i32, i32, i32
  }
  func.func @transform_1(%arg0: i32) -> (i32, i32) {
    %c0_i32 = arith.constant 0 : i32
    %c0_i32_0 = arith.constant 0 : i32
    %c0_i32_1 = arith.constant 0 : i32
    return %c0_i32, %c0_i32_0 : i32, i32
  }
  func.func @transform_2(%arg0: i32) -> (i32, i32) {
    %c0_i32 = arith.constant 0 : i32
    %c0_i32_0 = arith.constant 0 : i32
    %c0_i32_1 = arith.constant 0 : i32
    return %c0_i32, %c0_i32_0 : i32, i32
  }
  func.func @transform_3(%arg0: i32) -> (i32, i32) {
    %c0_i32 = arith.constant 0 : i32
    %c0_i32_0 = arith.constant 0 : i32
    %c0_i32_1 = arith.constant 0 : i32
    return %c0_i32, %c0_i32_0 : i32, i32
  }
  func.func @transform_4(%arg0: i32) -> (i32, i32) {
    %c0_i32 = arith.constant 0 : i32
    %c0_i32_0 = arith.constant 0 : i32
    %c0_i32_1 = arith.constant 0 : i32
    return %c0_i32, %c0_i32_0 : i32, i32
  }
  func.func @transform_5(%arg0: i32) -> (i32, i32, i32) {
    %c0_i32 = arith.constant 0 : i32
    %c0_i32_0 = arith.constant 0 : i32
    %c0_i32_1 = arith.constant 0 : i32
    return %arg0, %c0_i32, %c0_i32_0 : i32, i32, i32
  }
}

</mosaic_0001>

<llo_original>
// kernel: tpu_custom_call.1
$region0: #{tpu_custom_call.1}
  #allocation0 [shape = 'u32[]', space=smem, size = 0x4, offset = 0x4, fixed_abs, tag = 'smem constant byte address 0x4 - core index']
  #allocation1 [shape = 'u32[144,128]{1,0:T(1,128)}', space=vmem, size = 0x12000, scoped, tag = 'internal scratch']
  %s0 = inlined_call_operand.hbm [shape: f32[4,32,64], index: 0, kind: input, shape index: {}]
  %s1 = inlined_call_operand.hbm [shape: f32[64,256], index: 1, kind: input, shape index: {}]
  %s2 = inlined_call_operand.hbm [shape: f32[64,256], index: 2, kind: input, shape index: {}]
  %s3 = inlined_call_operand.vmem [shape: f32[1,128], index: 3, kind: input, shape index: {}]
  %s4 = inlined_call_operand.vmem [shape: f32[1,128], index: 4, kind: input, shape index: {}]
  %s5 = inlined_call_operand.vmem [shape: f32[4,31,128], index: 5, kind: output, shape index: {}]
  %s6 = sld [smem:[#allocation0]]
  $region65: #{tpu_custom_call.1} parent=0
    _
  %s8 = ssub.s32 1, %s6
  %s9 = scalar_select 0, %s8, %s6
  $region1: #{tpu_custom_call.1} parent=0
    #allocation2 [shape = 'u8[32768]{0}', space=vmem, size = 0x8000, scoped, tag = 'input window, operand 0']
    #allocation3 [shape = 's32[2]{0}', space=sflag, size = 0x8, scoped, tag = 'scoped memory for tpu_custom_call.1']
    #allocation4 [shape = 'u8[65536]{0}', space=vmem, size = 0x10000, scoped, tag = 'input window, operand 1, single buffered']
    #allocation5 [shape = 's32[1]{0}', space=sflag, size = 0x4, scoped, tag = 'scoped memory for tpu_custom_call.1']
    #allocation6 [shape = 'u8[65536]{0}', space=vmem, size = 0x10000, scoped, tag = 'input window, operand 2, single buffered']
    %10 = vsyncpa [#allocation3], 0
    %s11 = scalar_lea.sflag [#allocation3], 1
    %12 = vsyncpa %s11, 0
    %13 = vsyncpa [#allocation5], 0
    loop: start=0, step=1, limit=6
    $region2: #{tpu_custom_call.1} parent=1 // loop_pre_header
      _
    $region3: #{tpu_custom_call.1} parent=1 // loop_header
      %s15 = sphi 0, %s19
      %p16 = scmp.ge.s32.totalorder %s15, 6
      %s25 = sphi 0, %s27
      %s28 = sphi 0, %s25
      %s29 = sphi 0, %s28
      %s45 = sphi 0, %s29
      %s49 = sphi 0, %s49
      %s51 = sphi 0, %s49
      %s52 = sphi 0, %s51
      %s66 = sphi 0, %s52
      %s70 = sphi 0, %s70
      %s72 = sphi 0, %s70
      %s73 = sphi 0, %s72
      %s87 = sphi 0, %s73
      %s91 = sphi 0, %s91
      %s93 = sphi 0, %s91
      %s94 = sphi 0, %s93
      %s108 = sphi 0, %s94
      %s112 = sphi 0, %s112
      %s114 = sphi 0, %s112
      %s115 = sphi 0, %s114
      %s129 = sphi 0, %s115
      %s135 = sphi 0, %s137
      %s138 = sphi 0, %s135
      %s139 = sphi 0, %s138
      %s155 = sphi 0, %s139
    $region4: #{tpu_custom_call.1} parent=1 // loop_header_branch
      %18 = sbr.rel (%p16) target = $region8
    $region5: #{tpu_custom_call.1} parent=1 // loop_body
      %s20 = ssub.s32 %s15, 1
      %s21 = ssub.s32 %s15, 2
      %s22 = sadd.s32 %s15, 1
      %s23 = ssub.s32 %s15, %s22
      %p24 = scmp.eq.s32.totalorder %s23, 0
      %s26 = sadd.s32 %s25, 1
      %s27 = scalar_select %p24, %s25, %s26
      %p30 = pneg %p24
      %p31 = scmp.eq.s32.totalorder %s15, 3
      %p32 = por %p30, %p31
      %p33 = scmp.ne.s32.totalorder %s25, %s28
      %p34 = scmp.eq.s32.totalorder %s15, 0
      %p35 = por %p33, %p34
      %p36 = scmp.ne.s32.totalorder %s25, %s28
      %p37 = scmp.eq.s32.totalorder %s20, 3
      %p38 = por %p36, %p37
      %p39 = scmp.ne.s32.totalorder %s28, %s29
      %p40 = scmp.eq.s32.totalorder %s20, 0
      %p41 = por %p39, %p40
      %p42 = scmp.ne.s32.totalorder %s28, %s29
      %p43 = scmp.eq.s32.totalorder %s21, 3
      %p44 = por %p42, %p43
      %p46 = scmp.ne.s32.totalorder %s29, %s45
      %p47 = scmp.eq.s32.totalorder %s21, 0
      %p48 = por %p46, %p47
      %s50 = sadd.s32 %s49, 1
      %p53 = scmp.eq.s32.totalorder %s15, 3
      %p54 = scmp.ne.s32.totalorder %s49, %s51
      %p55 = scmp.eq.s32.totalorder %s15, 0
      %p56 = por %p54, %p55
      %p57 = scmp.ne.s32.totalorder %s49, %s51
      %p58 = scmp.eq.s32.totalorder %s20, 3
      %p59 = por %p57, %p58
      %p60 = scmp.ne.s32.totalorder %s51, %s52
      %p61 = scmp.eq.s32.totalorder %s20, 0
      %p62 = por %p60, %p61
      %p63 = scmp.ne.s32.totalorder %s51, %s52
      %p64 = scmp.eq.s32.totalorder %s21, 3
      %p65 = por %p63, %p64
      %p67 = scmp.ne.s32.totalorder %s52, %s66
      %p68 = scmp.eq.s32.totalorder %s21, 0
      %p69 = por %p67, %p68
      %s71 = sadd.s32 %s70, 1
      %p74 = scmp.eq.s32.totalorder %s15, 3
      %p75 = scmp.ne.s32.totalorder %s70, %s72
      %p76 = scmp.eq.s32.totalorder %s15, 0
      %p77 = por %p75, %p76
      %p78 = scmp.ne.s32.totalorder %s70, %s72
      %p79 = scmp.eq.s32.totalorder %s20, 3
      %p80 = por %p78, %p79
      %p81 = scmp.ne.s32.totalorder %s72, %s73
      %p82 = scmp.eq.s32.totalorder %s20, 0
      %p83 = por %p81, %p82
      %p84 = scmp.ne.s32.totalorder %s72, %s73
      %p85 = scmp.eq.s32.totalorder %s21, 3
      %p86 = por %p84, %p85
      %p88 = scmp.ne.s32.totalorder %s73, %s87
      %p89 = scmp.eq.s32.totalorder %s21, 0
      %p90 = por %p88, %p89
      %s92 = sadd.s32 %s91, 1
      %p95 = scmp.eq.s32.totalorder %s15, 3
      %p96 = scmp.ne.s32.totalorder %s91, %s93
      %p97 = scmp.eq.s32.totalorder %s15, 0
      %p98 = por %p96, %p97
      %p99 = scmp.ne.s32.totalorder %s91, %s93
      %p100 = scmp.eq.s32.totalorder %s20, 3
      %p101 = por %p99, %p100
      %p102 = scmp.ne.s32.totalorder %s93, %s94
      %p103 = scmp.eq.s32.totalorder %s20, 0
      %p104 = por %p102, %p103
      %p105 = scmp.ne.s32.totalorder %s93, %s94
      %p106 = scmp.eq.s32.totalorder %s21, 3
      %p107 = por %p105, %p106
      %p109 = scmp.ne.s32.totalorder %s94, %s108
      %p110 = scmp.eq.s32.totalorder %s21, 0
      %p111 = por %p109, %p110
      %s113 = sadd.s32 %s112, 1
      %p116 = scmp.eq.s32.totalorder %s15, 3
      %p117 = scmp.ne.s32.totalorder %s112, %s114
      %p118 = scmp.eq.s32.totalorder %s15, 0
      %p119 = por %p117, %p118
      %p120 = scmp.ne.s32.totalorder %s112, %s114
      %p121 = scmp.eq.s32.totalorder %s20, 3
      %p122 = por %p120, %p121
      %p123 = scmp.ne.s32.totalorder %s114, %s115
      %p124 = scmp.eq.s32.totalorder %s20, 0
      %p125 = por %p123, %p124
      %p126 = scmp.ne.s32.totalorder %s114, %s115
      %p127 = scmp.eq.s32.totalorder %s21, 3
      %p128 = por %p126, %p127
      %p130 = scmp.ne.s32.totalorder %s115, %s129
      %p131 = scmp.eq.s32.totalorder %s21, 0
      %p132 = por %p130, %p131
      %s133 = ssub.s32 %s15, %s22
      %p134 = scmp.eq.s32.totalorder %s133, 0
      %s136 = sadd.s32 %s135, 1
      %s137 = scalar_select %p134, %s135, %s136
      %p140 = pneg %p134
      %p141 = scmp.eq.s32.totalorder %s15, 3
      %p142 = por %p140, %p141
      %p143 = scmp.ne.s32.totalorder %s135, %s138
      %p144 = scmp.eq.s32.totalorder %s15, 0
      %p145 = por %p143, %p144
      %p146 = scmp.ne.s32.totalorder %s135, %s138
      %p147 = scmp.eq.s32.totalorder %s20, 3
      %p148 = por %p146, %p147
      %p149 = scmp.ne.s32.totalorder %s138, %s139
      %p150 = scmp.eq.s32.totalorder %s20, 0
      %p151 = por %p149, %p150
      %p152 = scmp.ne.s32.totalorder %s138, %s139
      %p153 = scmp.eq.s32.totalorder %s21, 3
      %p154 = por %p152, %p153
      %p156 = scmp.ne.s32.totalorder %s139, %s155
      %p157 = scmp.eq.s32.totalorder %s21, 0
      %p158 = por %p156, %p157
      %p159 = scmp.le.s32.totalorder 1, %s15
      %p160 = scmp.lt.s32.totalorder %s15, 5
      %p161 = pnand %p159, %p160
      %p162 = pneg %p161
      // Predicated region
      $region9: #{tpu_custom_call.1} parent=5 // pred_check
        _
      $region10: #{tpu_custom_call.1} parent=5 // pred_check_branch
        %164 = sbr.rel (%p161) target = $region12
      $region11: #{tpu_custom_call.1} parent=5 // pred_region
        %s165 = ssub.s32 %s15, 1
        // Predicated region
        $region13: #{tpu_custom_call.1} parent=11 // pred_check
          %p166 = pneg %p62
        $region14: #{tpu_custom_call.1} parent=11 // pred_check_branch
          %168 = sbr.rel (%p166) target = $region16
        $region15: #{tpu_custom_call.1} parent=11 // pred_region
          %s170 = ssub.s32 2048, 2048
          %171 = vsyncadd [#allocation5], %s170
          %s172 = sshll.u32 [#allocation4], 4
          %s173 = int_to_ptr.vmem [resolvable:$true] %s172
          %178 = dma.hbm_to_vmem [thread:$0]  %s1, 2048, %s173, [#allocation5], 256, 256, 16
        $region16: #{tpu_custom_call.1} parent=11 // pred_fallthru
          _
        // Predicated region
        $region17: #{tpu_custom_call.1} parent=11 // pred_check
          %p179 = pneg %p83
        $region18: #{tpu_custom_call.1} parent=11 // pred_check_branch
          %181 = sbr.rel (%p179) target = $region20
        $region19: #{tpu_custom_call.1} parent=11 // pred_region
          %s183 = ssub.s32 2048, 2048
          %184 = vsyncadd [#allocation5], %s183
          %s185 = sshll.u32 [#allocation6], 4
          %s186 = int_to_ptr.vmem [resolvable:$true] %s185
          %191 = dma.hbm_to_vmem [thread:$0]  %s2, 2048, %s186, [#allocation5], 256, 256, 16
        $region20: #{tpu_custom_call.1} parent=11 // pred_fallthru
          _
        // Predicated region
        $region21: #{tpu_custom_call.1} parent=11 // pred_check
          %p192 = pneg %p104
        $region22: #{tpu_custom_call.1} parent=11 // pred_check_branch
          %194 = sbr.rel (%p192) target = $region24
        $region23: #{tpu_custom_call.1} parent=11 // pred_region
          _
        $region24: #{tpu_custom_call.1} parent=11 // pred_fallthru
          _
        // Predicated region
        $region25: #{tpu_custom_call.1} parent=11 // pred_check
          %p195 = pneg %p125
        $region26: #{tpu_custom_call.1} parent=11 // pred_check_branch
          %197 = sbr.rel (%p195) target = $region28
        $region27: #{tpu_custom_call.1} parent=11 // pred_region
          _
        $region28: #{tpu_custom_call.1} parent=11 // pred_fallthru
          _
      $region12: #{tpu_custom_call.1} parent=5 // pred_fallthru
        _
      %p198 = scmp.lt.s32.totalorder %s15, 4
      // Predicated region
      $region29: #{tpu_custom_call.1} parent=5 // pred_check
        %p199 = pneg %p198
      $region30: #{tpu_custom_call.1} parent=5 // pred_check_branch
        %201 = sbr.rel (%p199) target = $region32
      $region31: #{tpu_custom_call.1} parent=5 // pred_region
        // Predicated region
        $region33: #{tpu_custom_call.1} parent=31 // pred_check
          %p202 = pneg %p35
        $region34: #{tpu_custom_call.1} parent=31 // pred_check_branch
          %204 = sbr.rel (%p202) target = $region36
        $region35: #{tpu_custom_call.1} parent=31 // pred_region
          %s205 = sand.u32 %s25, 1
          %s206 = scalar_lea.sflag [#allocation3], %s205
          %s207 = sand.u32 %s25, 1
          %s208 = smul.addr %s207, 32
          %s209 = scalar_lea.vmem [#allocation2], %s208
          %s211 = ssub.s32 512, 512
          %212 = vsyncadd %s206, %s211
          %s213 = smul.addr %s15, 4
          %s214 = smul.addr %s213, 128
          %s215 = scalar_lea.hbm %s0, %s214
          %s216 = sshll.u32 %s209, 4
          %s217 = int_to_ptr.vmem [resolvable:$true] %s216
          %222 = dma.hbm_to_vmem [thread:$0]  %s215, 512, %s217, %s206, 128, 128, 8
        $region36: #{tpu_custom_call.1} parent=31 // pred_fallthru
          _
      $region32: #{tpu_custom_call.1} parent=5 // pred_fallthru
        _
      %p223 = scmp.le.s32.totalorder 1, %s15
      %p224 = scmp.lt.s32.totalorder %s15, 5
      %p225 = pnand %p223, %p224
      %p226 = pneg %p225
      // Predicated region
      $region37: #{tpu_custom_call.1} parent=5 // pred_check
        _
      $region38: #{tpu_custom_call.1} parent=5 // pred_check_branch
        %228 = sbr.rel (%p225) target = $region40
      $region39: #{tpu_custom_call.1} parent=5 // pred_region
        %s229 = ssub.s32 %s15, 1
        %s230 = sand.u32 %s28, 1
        %s231 = scalar_lea.sflag [#allocation3], %s230
        %s232 = sand.u32 %s28, 1
        %s233 = smul.addr %s232, 32
        %s234 = scalar_lea.vmem [#allocation2], %s233
        // Predicated region
        $region41: #{tpu_custom_call.1} parent=39 // pred_check
          %p235 = pneg %p41
        $region42: #{tpu_custom_call.1} parent=39 // pred_check_branch
          %237 = sbr.rel (%p235) target = $region44
        $region43: #{tpu_custom_call.1} parent=39 // pred_region
          %238 = dma.done %s231, 512
        $region44: #{tpu_custom_call.1} parent=39 // pred_fallthru
          _
        // Predicated region
        $region45: #{tpu_custom_call.1} parent=39 // pred_check
          %p239 = pneg %p62
        $region46: #{tpu_custom_call.1} parent=39 // pred_check_branch
          %241 = sbr.rel (%p239) target = $region48
        $region47: #{tpu_custom_call.1} parent=39 // pred_region
          %242 = dma.done [#allocation5], 2048
        $region48: #{tpu_custom_call.1} parent=39 // pred_fallthru
          _
        // Predicated region
        $region49: #{tpu_custom_call.1} parent=39 // pred_check
          %p243 = pneg %p83
        $region50: #{tpu_custom_call.1} parent=39 // pred_check_branch
          %245 = sbr.rel (%p243) target = $region52
        $region51: #{tpu_custom_call.1} parent=39 // pred_region
          %246 = dma.done [#allocation5], 2048
        $region52: #{tpu_custom_call.1} parent=39 // pred_fallthru
          _
        %s247 = sand.u32 %s28, 1
        %s248 = scalar_lea.sflag [#allocation3], %s247
        %s249 = sand.u32 %s28, 1
        %s250 = smul.addr %s249, 32
        %s251 = scalar_lea.vmem [#allocation2], %s250
        %p252 = pneg %p41
        %p253 = pneg %p38
        %p254 = pneg %p62
        %p255 = pneg %p59
        %p256 = pneg %p83
        %p257 = pneg %p80
        %p258 = pneg %p104
        %p259 = pneg %p101
        %p260 = pneg %p125
        %p261 = pneg %p122
        %p262 = pneg %p151
        %p263 = pneg %p148
        %p264 = scmp.lt.s32.totalorder %s20, 3
        %s265 = scalar_select %p264, %s20, 3
        %s266 = smul.addr %s265, 4
        %s267 = smul.addr %s266, 8
        %s268 = scalar_lea.vmem %s5, %s267
        %p269 = scmp.lt.s32.totalorder %s20, 3
        %s270 = scalar_select %p269, %s20, 3
        %s271 = smul.addr %s270, 4
        %s272 = smul.addr %s271, 8
        %s273 = scalar_lea.vmem %s5, %s272
        %v274 = vld [vmem:[%s234] sm:$0xff]
        %v275 = vld [vmem:[%s234 + $0x8] sm:$0xff]
        %v276 = vld [vmem:[%s234 + $0x10] sm:$0xff]
        %v277 = vld [vmem:[%s234 + $0x18] sm:$0x7f]
        %v278 = vld [vmem:[%s234 + $0x1] sm:$0xff]
        %v279 = vld [vmem:[%s234 + $0x9] sm:$0xff]
        %v280 = vld [vmem:[%s234 + $0x11] sm:$0xff]
        %v281 = vld [vmem:[%s234 + $0x19] sm:$0x7f]
        %vm282 = vcmask 523264
        %v283 = vsel %vm282, %v274, 0.0
        %284 = vadd.xlane.f32.xlu0 %v283
        %v285 = vpop.xlane.xlu0 %284
        %v286 = vsel %vm282, %v275, 0.0
        %287 = vadd.xlane.f32.xlu0 %v286
        %v288 = vpop.xlane.xlu0 %287
        %v289 = vsel %vm282, %v276, 0.0
        %290 = vadd.xlane.f32.xlu0 %v289
        %v291 = vpop.xlane.xlu0 %290
        %vm292 = vcmask 522240
        %v293 = vsel %vm292, %v277, 0.0
        %294 = vadd.xlane.f32.xlu0 %v293
        %v295 = vpop.xlane.xlu0 %294
        %v296 = vsel %vm282, %v278, 0.0
        %297 = vadd.xlane.f32.xlu0 %v296
        %v298 = vpop.xlane.xlu0 %297
        %v299 = vsel %vm282, %v279, 0.0
        %300 = vadd.xlane.f32.xlu0 %v299
        %v301 = vpop.xlane.xlu0 %300
        %v302 = vsel %vm282, %v280, 0.0
        %303 = vadd.xlane.f32.xlu0 %v302
        %v304 = vpop.xlane.xlu0 %303
        %v305 = vsel %vm292, %v281, 0.0
        %306 = vadd.xlane.f32.xlu0 %v305
        %v307 = vpop.xlane.xlu0 %306
        %v308 = vadd.f32 %v285, %v298
        %v309 = vadd.f32 %v288, %v301
        %v310 = vadd.f32 %v291, %v304
        %v311 = vadd.f32 %v295, %v307
        %v312 = vmul.f32 %v308, 0.0078125
        %v313 = vmul.f32 %v309, 0.0078125
        %v314 = vmul.f32 %v310, 0.0078125
        %v315 = vmul.f32 %v311, 0.0078125
        %v316 = vsub.f32 %v274, %v312
        %v317 = vsub.f32 %v275, %v313
        %v318 = vsub.f32 %v276, %v314
        %v319 = vsub.f32 %v277, %v315
        %v320 = vsub.f32 %v278, %v312
        %v321 = vsub.f32 %v279, %v313
        %v322 = vsub.f32 %v280, %v314
        %v323 = vsub.f32 %v281, %v315
        %v324 = vmul.f32 %v316, %v316
        %v325 = vmul.f32 %v317, %v317
        %v326 = vmul.f32 %v318, %v318
        %v327 = vmul.f32 %v319, %v319
        %v328 = vsel %vm282, %v324, 0.0
        %329 = vadd.xlane.f32.xlu0 %v328
        %v330 = vpop.xlane.xlu0 %329
        %v331 = vsel %vm282, %v325, 0.0
        %332 = vadd.xlane.f32.xlu0 %v331
        %v333 = vpop.xlane.xlu0 %332
        %v334 = vsel %vm282, %v326, 0.0
        %335 = vadd.xlane.f32.xlu0 %v334
        %v336 = vpop.xlane.xlu0 %335
        %v337 = vsel %vm292, %v327, 0.0
        %338 = vadd.xlane.f32.xlu0 %v337
        %v339 = vpop.xlane.xlu0 %338
        %v340 = vmul.f32 %v320, %v320
        %v341 = vmul.f32 %v321, %v321
        %v342 = vmul.f32 %v322, %v322
        %v343 = vmul.f32 %v323, %v323
        %v344 = vsel %vm282, %v340, 0.0
        %345 = vadd.xlane.f32.xlu0 %v344
        %v346 = vpop.xlane.xlu0 %345
        %v347 = vsel %vm282, %v341, 0.0
        %348 = vadd.xlane.f32.xlu0 %v347
        %v349 = vpop.xlane.xlu0 %348
        %v350 = vsel %vm282, %v342, 0.0
        %351 = vadd.xlane.f32.xlu0 %v350
        %v352 = vpop.xlane.xlu0 %351
        %v353 = vsel %vm292, %v343, 0.0
        %354 = vadd.xlane.f32.xlu0 %v353
        %v355 = vpop.xlane.xlu0 %354
        %v356 = vadd.f32 %v330, %v346
        %v357 = vadd.f32 %v333, %v349
        %v358 = vadd.f32 %v336, %v352
        %v359 = vadd.f32 %v339, %v355
        %v360 = vmax.f32 %v356, 1.1920929e-07
        %v361 = vmax.f32 %v357, 1.1920929e-07
        %v362 = vmax.f32 %v358, 1.1920929e-07
        %v363 = vmax.f32 %v359, 1.1920929e-07
        %v364 = vlog2.pop %v360
        %v365 = vmul.f32 %v364, 0.6931472
        %v366 = vlog2.pop %v361
        %v367 = vmul.f32 %v366, 0.6931472
        %v368 = vlog2.pop %v362
        %v369 = vmul.f32 %v368, 0.6931472
        %v370 = vlog2.pop %v363
        %v371 = vmul.f32 %v370, 0.6931472
        %v372 = vld [vmem:[#allocation4] sm:$0xff]
        %v373 = vld [vmem:[#allocation4 + $0x8] sm:$0xff]
        %v374 = vld [vmem:[#allocation4 + $0x10] sm:$0xff]
        %v375 = vld [vmem:[#allocation4 + $0x18] sm:$0xff]
        %v376 = vld [vmem:[#allocation4 + $0x20] sm:$0xff]
        %v377 = vld [vmem:[#allocation4 + $0x28] sm:$0xff]
        %v378 = vld [vmem:[#allocation4 + $0x30] sm:$0xff]
        %v379 = vld [vmem:[#allocation4 + $0x38] sm:$0xff]
        %v380 = vld [vmem:[#allocation4 + $0x40] sm:$0xff]
        %v381 = vld [vmem:[#allocation4 + $0x48] sm:$0xff]
        %v382 = vld [vmem:[#allocation4 + $0x50] sm:$0xff]
        %v383 = vld [vmem:[#allocation4 + $0x58] sm:$0xff]
        %v384 = vld [vmem:[#allocation4 + $0x60] sm:$0xff]
        %v385 = vld [vmem:[#allocation4 + $0x68] sm:$0xff]
        %v386 = vld [vmem:[#allocation4 + $0x70] sm:$0xff]
        %v387 = vld [vmem:[#allocation4 + $0x78] sm:$0xff]
        %v388 = vld [vmem:[#allocation6] sm:$0xff]
        %v389 = vld [vmem:[#allocation6 + $0x8] sm:$0xff]
        %v390 = vld [vmem:[#allocation6 + $0x10] sm:$0xff]
        %v391 = vld [vmem:[#allocation6 + $0x18] sm:$0xff]
        %v392 = vld [vmem:[#allocation6 + $0x20] sm:$0xff]
        %v393 = vld [vmem:[#allocation6 + $0x28] sm:$0xff]
        %v394 = vld [vmem:[#allocation6 + $0x30] sm:$0xff]
        %v395 = vld [vmem:[#allocation6 + $0x38] sm:$0xff]
        %v396 = vld [vmem:[#allocation6 + $0x40] sm:$0xff]
        %v397 = vld [vmem:[#allocation6 + $0x48] sm:$0xff]
        %v398 = vld [vmem:[#allocation6 + $0x50] sm:$0xff]
        %v399 = vld [vmem:[#allocation6 + $0x58] sm:$0xff]
        %v400 = vld [vmem:[#allocation6 + $0x60] sm:$0xff]
        %v401 = vld [vmem:[#allocation6 + $0x68] sm:$0xff]
        %v402 = vld [vmem:[#allocation6 + $0x70] sm:$0xff]
        %v403 = vld [vmem:[#allocation6 + $0x78] sm:$0xff]
        %v405 = vsel %vm282, %v320, 0
        %v408 = vsel %vm282, %v321, 0
        %v411 = vsel %vm282, %v322, 0
        %v414 = vsel %vm282, %v323, 0
        %416 = vmatprep.subr.mxu0 %v389
        %417 = vmatpush1.msra.mxu0 %v388
        %418 = vmatprep.subr.mxu0 %v391
        %419 = vmatpush1.msra.mxu0 %v390
        %420 = vmatprep.subr.mxu0 %v393
        %421 = vmatpush1.msra.mxu0 %v392
        %422 = vmatprep.subr.mxu0 %v395
        %423 = vmatpush1.msra.mxu0 %v394
        %424 = vmatprep.subr.mxu0 %v397
        %425 = vmatpush1.msra.mxu0 %v396
        %426 = vmatprep.subr.mxu0 %v399
        %427 = vmatpush1.msra.mxu0 %v398
        %428 = vmatprep.subr.mxu0 %v401
        %429 = vmatpush1.msra.mxu0 %v400
        %430 = vmatprep.subr.mxu0 %v403
        %431 = vmatpush1.msra.mxu0 %v402
        %432 = vmatprep.subr.mxu0 0.0
        %433 = vmatpush1.msra.mxu0 0.0
        %434 = vmatprep.subr.mxu0 0.0
        %435 = vmatpush1.msra.mxu0 0.0
        %436 = vmatprep.subr.mxu0 0.0
        %437 = vmatpush1.msra.mxu0 0.0
        %438 = vmatprep.subr.mxu0 0.0
        %439 = vmatpush1.msra.mxu0 0.0
        %440 = vmatprep.subr.mxu0 0.0
        %441 = vmatpush1.msra.mxu0 0.0
        %442 = vmatprep.subr.mxu0 0.0
        %443 = vmatpush1.msra.mxu0 0.0
        %444 = vmatprep.subr.mxu0 0.0
        %445 = vmatpush1.msra.mxu0 0.0
        %446 = vmatprep.subr.mxu0 0.0
        %447 = vmatpush1.msra.mxu0 0.0
        %448 = vmatprep.subr.mxu0 0.0
        %449 = vmatpush1.msra.mxu0 0.0
        %450 = vmatprep.subr.mxu0 0.0
        %451 = vmatpush1.msra.mxu0 0.0
        %452 = vmatprep.subr.mxu0 0.0
        %453 = vmatpush1.msra.mxu0 0.0
        %454 = vmatprep.subr.mxu0 0.0
        %455 = vmatpush1.msra.mxu0 0.0
        %456 = vmatprep.subr.mxu0 0.0
        %457 = vmatpush1.msra.mxu0 0.0
        %458 = vmatprep.subr.mxu0 0.0
        %459 = vmatpush1.msra.mxu0 0.0
        %460 = vmatprep.subr.mxu0 0.0
        %461 = vmatpush1.msra.mxu0 0.0
        %462 = vmatprep.subr.mxu0 0.0
        %463 = vmatpush1.msra.mxu0 0.0
        %464 = vmatprep.subr.mxu0 0.0
        %465 = vmatpush1.msra.mxu0 0.0
        %466 = vmatprep.subr.mxu0 0.0
        %467 = vmatpush1.msra.mxu0 0.0
        %468 = vmatprep.subr.mxu0 0.0
        %469 = vmatpush1.msra.mxu0 0.0
        %470 = vmatprep.subr.mxu0 0.0
        %471 = vmatpush1.msra.mxu0 0.0
        %472 = vmatprep.subr.mxu0 0.0
        %473 = vmatpush1.msra.mxu0 0.0
        %474 = vmatprep.subr.mxu0 0.0
        %475 = vmatpush1.msra.mxu0 0.0
        %476 = vmatprep.subr.mxu0 0.0
        %477 = vmatpush1.msra.mxu0 0.0
        %478 = vmatprep.subr.mxu0 0.0
        %479 = vmatpush1.msra.mxu0 0.0
        %480 = vmatprep.mubr.f32.mxu0 0.0
        %481 = vmatmul.mubr.f32.gmra.mrb[0].mxu0 %v405
        %v482 = vpop.f32.mrb[0].mxu0
        %v483 = vadd.f32 0.0, %v482
        %v484 = vpop.f32.mrb[0].mxu0
        %v485 = vadd.f32 0.0, %v484
        %486 = vmatprep.mubr.f32.mxu0 0.0
        %487 = vmatmul.mubr.f32.gmra.mrb[0].mxu0 %v408
        %v488 = vpop.f32.mrb[0].mxu0
        %v489 = vadd.f32 0.0, %v488
        %v490 = vpop.f32.mrb[0].mxu0
        %v491 = vadd.f32 0.0, %v490
        %492 = vmatprep.mubr.f32.mxu0 0.0
        %493 = vmatmul.mubr.f32.gmra.mrb[0].mxu0 %v411
        %v494 = vpop.f32.mrb[0].mxu0
        %v495 = vadd.f32 0.0, %v494
        %v496 = vpop.f32.mrb[0].mxu0
        %v497 = vadd.f32 0.0, %v496
        %498 = vmatprep.mubr.f32.mxu0 0.0
        %499 = vmatmul.mubr.f32.gmra.mrb[0].mxu0 %v414
        %v500 = vpop.f32.mrb[0].mxu0
        %v501 = vadd.f32 0.0, %v500
        %v502 = vpop.f32.mrb[0].mxu0
        %v503 = vadd.f32 0.0, %v502
        %504 = vdwg.mxu0
        %v506 = vsel %vm282, %v316, 0
        %v509 = vsel %vm282, %v317, 0
        %v512 = vsel %vm282, %v318, 0
        %v515 = vsel %vm282, %v319, 0
        %517 = vmatprep.subr.mxu0 %v373
        %518 = vmatpush1.msra.mxu0 %v372
        %519 = vmatprep.subr.mxu0 %v375
        %520 = vmatpush1.msra.mxu0 %v374
        %521 = vmatprep.subr.mxu0 %v377
        %522 = vmatpush1.msra.mxu0 %v376
        %523 = vmatprep.subr.mxu0 %v379
        %524 = vmatpush1.msra.mxu0 %v378
        %525 = vmatprep.subr.mxu0 %v381
        %526 = vmatpush1.msra.mxu0 %v380
        %527 = vmatprep.subr.mxu0 %v383
        %528 = vmatpush1.msra.mxu0 %v382
        %529 = vmatprep.subr.mxu0 %v385
        %530 = vmatpush1.msra.mxu0 %v384
        %531 = vmatprep.subr.mxu0 %v387
        %532 = vmatpush1.msra.mxu0 %v386
        %533 = vmatprep.subr.mxu0 0.0
        %534 = vmatpush1.msra.mxu0 0.0
        %535 = vmatprep.subr.mxu0 0.0
        %536 = vmatpush1.msra.mxu0 0.0
        %537 = vmatprep.subr.mxu0 0.0
        %538 = vmatpush1.msra.mxu0 0.0
        %539 = vmatprep.subr.mxu0 0.0
        %540 = vmatpush1.msra.mxu0 0.0
        %541 = vmatprep.subr.mxu0 0.0
        %542 = vmatpush1.msra.mxu0 0.0
        %543 = vmatprep.subr.mxu0 0.0
        %544 = vmatpush1.msra.mxu0 0.0
        %545 = vmatprep.subr.mxu0 0.0
        %546 = vmatpush1.msra.mxu0 0.0
        %547 = vmatprep.subr.mxu0 0.0
        %548 = vmatpush1.msra.mxu0 0.0
        %549 = vmatprep.subr.mxu0 0.0
        %550 = vmatpush1.msra.mxu0 0.0
        %551 = vmatprep.subr.mxu0 0.0
        %552 = vmatpush1.msra.mxu0 0.0
        %553 = vmatprep.subr.mxu0 0.0
        %554 = vmatpush1.msra.mxu0 0.0
        %555 = vmatprep.subr.mxu0 0.0
        %556 = vmatpush1.msra.mxu0 0.0
        %557 = vmatprep.subr.mxu0 0.0
        %558 = vmatpush1.msra.mxu0 0.0
        %559 = vmatprep.subr.mxu0 0.0
        %560 = vmatpush1.msra.mxu0 0.0
        %561 = vmatprep.subr.mxu0 0.0
        %562 = vmatpush1.msra.mxu0 0.0
        %563 = vmatprep.subr.mxu0 0.0
        %564 = vmatpush1.msra.mxu0 0.0
        %565 = vmatprep.subr.mxu0 0.0
        %566 = vmatpush1.msra.mxu0 0.0
        %567 = vmatprep.subr.mxu0 0.0
        %568 = vmatpush1.msra.mxu0 0.0
        %569 = vmatprep.subr.mxu0 0.0
        %570 = vmatpush1.msra.mxu0 0.0
        %571 = vmatprep.subr.mxu0 0.0
        %572 = vmatpush1.msra.mxu0 0.0
        %573 = vmatprep.subr.mxu0 0.0
        %574 = vmatpush1.msra.mxu0 0.0
        %575 = vmatprep.subr.mxu0 0.0
        %576 = vmatpush1.msra.mxu0 0.0
        %577 = vmatprep.subr.mxu0 0.0
        %578 = vmatpush1.msra.mxu0 0.0
        %579 = vmatprep.subr.mxu0 0.0
        %580 = vmatpush1.msra.mxu0 0.0
        %581 = vmatprep.mubr.f32.mxu0 0.0
        %582 = vmatmul.mubr.f32.gmra.mrb[0].mxu0 %v506
        %v583 = vpop.f32.mrb[0].mxu0
        %v584 = vadd.f32 %v483, %v583
        %v585 = vpop.f32.mrb[0].mxu0
        %v586 = vadd.f32 %v485, %v585
        %587 = vmatprep.mubr.f32.mxu0 0.0
        %588 = vmatmul.mubr.f32.gmra.mrb[0].mxu0 %v509
        %v589 = vpop.f32.mrb[0].mxu0
        %v590 = vadd.f32 %v489, %v589
        %v591 = vpop.f32.mrb[0].mxu0
        %v592 = vadd.f32 %v491, %v591
        %593 = vmatprep.mubr.f32.mxu0 0.0
        %594 = vmatmul.mubr.f32.gmra.mrb[0].mxu0 %v512
        %v595 = vpop.f32.mrb[0].mxu0
        %v596 = vadd.f32 %v495, %v595
        %v597 = vpop.f32.mrb[0].mxu0
        %v598 = vadd.f32 %v497, %v597
        %599 = vmatprep.mubr.f32.mxu0 0.0
        %600 = vmatmul.mubr.f32.gmra.mrb[0].mxu0 %v515
        %v601 = vpop.f32.mrb[0].mxu0
        %v602 = vadd.f32 %v501, %v601
        %v603 = vpop.f32.mrb[0].mxu0
        %v604 = vadd.f32 %v503, %v603
        %605 = vdwg.mxu0
        %v606 = vmul.f32 %v584, %v584
        %v607 = vmul.f32 %v590, %v590
        %v608 = vmul.f32 %v596, %v596
        %v609 = vmul.f32 %v602, %v602
        %v610 = vmul.f32 %v586, %v586
        %v611 = vmul.f32 %v592, %v592
        %v612 = vmul.f32 %v598, %v598
        %v613 = vmul.f32 %v604, %v604
        %v614 = vadd.f32 %v606, %v610
        %v615 = vadd.f32 %v607, %v611
        %v616 = vadd.f32 %v608, %v612
        %v617 = vadd.f32 %v609, %v613
        %v618 = vmax.f32 %v614, 1.1920929e-07
        %v619 = vmax.f32 %v615, 1.1920929e-07
        %v620 = vmax.f32 %v616, 1.1920929e-07
        %v621 = vmax.f32 %v617, 1.1920929e-07
        %v622 = vlog2.pop %v618
        %v623 = vmul.f32 %v622, 0.6931472
        %v624 = vlog2.pop %v619
        %v625 = vmul.f32 %v624, 0.6931472
        %v626 = vlog2.pop %v620
        %v627 = vmul.f32 %v626, 0.6931472
        %v628 = vlog2.pop %v621
        %v629 = vmul.f32 %v628, 0.6931472
        %v630 = vld [vmem:[%s3] sm:$0x1]
        %v631 = vsub.f32 %v365, %v623
        %v632 = vsub.f32 %v367, %v625
        %v633 = vsub.f32 %v369, %v627
        %v634 = vsub.f32 %v371, %v629
        %v636 = vlaneseq
        %v637 = vshrl.u32 %v636, 7
        %v638 = vsub.s32 0, %v637
        %v639 = vrot.slane %v630, %v638
        %v641 = vmul.f32 %v639, %v631
        %v642 = vmul.f32 %v639, %v632
        %v643 = vmul.f32 %v639, %v633
        %v644 = vmul.f32 %v639, %v634
        %v645 = vadd.f32 %v623, %v641
        %v646 = vadd.f32 %v625, %v642
        %v647 = vadd.f32 %v627, %v643
        %v648 = vadd.f32 %v629, %v644
        %v649 = vadd.f32 %v645, %v646
        %v650 = vadd.f32 %v649, %v647
        %vm651 = vcmask 1046528
        %v652 = vsel %vm651, %v648, 0.0
        %v653 = vadd.f32 %v650, %v652
        %v654 = vrot.slane %v653, 4
        %v655 = vadd.f32 %v653, %v654
        %v656 = vrot.slane %v655, 2
        %v657 = vadd.f32 %v655, %v656
        %v658 = vrot.slane %v657, 1
        %v659 = vadd.f32 %v657, %v658
        %v660 = vrcp.pop 31.0
        %v661 = vmul.f32 %v659, %v660
        %v662 = vsub.f32 %v645, %v661
        %v663 = vsub.f32 %v646, %v661
        %v664 = vsub.f32 %v647, %v661
        %v665 = vsub.f32 %v648, %v661
        %v666 = vmul.f32 %v662, %v662
        %v667 = vmul.f32 %v663, %v663
        %v668 = vmul.f32 %v664, %v664
        %v669 = vmul.f32 %v665, %v665
        %v670 = vadd.f32 %v666, %v667
        %v671 = vadd.f32 %v670, %v668
        %v672 = vsel %vm651, %v669, 0.0
        %v673 = vadd.f32 %v671, %v672
        %v674 = vrot.slane %v673, 4
        %v675 = vadd.f32 %v673, %v674
        %v676 = vrot.slane %v675, 2
        %v677 = vadd.f32 %v675, %v676
        %v678 = vrot.slane %v677, 1
        %v679 = vadd.f32 %v677, %v678
        %v680 = vmul.f32 %v679, 0.033333335
        %v681 = vrsqrt.pop %v680
        %v682 = vmul.f32 %v680, %v681
        %vm683 = vcmp.eq.f32.partialorder %v680, inf
        %v684 = vsel %vm683, %v680, %v682
        %vm685 = vcmp.eq.f32.partialorder %v680, 0.0
        %v686 = vand.u32 %v680, 2147483648
        %v687 = vsel %vm685, %v686, %v684
        %v688 = vadd.f32 %v687, 1e-10
        %v689 = vrcp.pop %v688
        %v690 = vld [vmem:[%s4] sm:$0x1]
        %v691 = vmul.f32 %v689, %v690
        %v692 = vlaneseq
        %v693 = vshrl.u32 %v692, 7
        %v694 = vsub.s32 0, %v693
        %v695 = vrot.slane %v691, %v694
        %v696 = vmul.f32 %v662, %v695
        %v697 = vmul.f32 %v663, %v695
        %v698 = vmul.f32 %v664, %v695
        %v699 = vmul.f32 %v665, %v695
        %700 = vst [vmem:[%s273] sm:$0xff] %v696
        %701 = vst [vmem:[%s273 + $0x8] sm:$0xff] %v697
        %702 = vst [vmem:[%s273 + $0x10] sm:$0xff] %v698
        %703 = vst [vmem:[%s273 + $0x18] sm:$0x7f] %v699
        %p704 = scmp.lt.s32.totalorder %s20, 3
        %s705 = scalar_select %p704, %s20, 3
        %s706 = smul.addr %s705, 4
        %s707 = smul.addr %s706, 8
        %s708 = scalar_lea.vmem %s5, %s707
        // Predicated region
        $region53: #{tpu_custom_call.1} parent=39 // pred_check
          %p709 = pneg %p148
        $region54: #{tpu_custom_call.1} parent=39 // pred_check_branch
          %711 = sbr.rel (%p709) target = $region56
        $region55: #{tpu_custom_call.1} parent=39 // pred_region
          _
        $region56: #{tpu_custom_call.1} parent=39 // pred_fallthru
          _
      $region40: #{tpu_custom_call.1} parent=5 // pred_fallthru
        _
      %p712 = scmp.le.s32.totalorder 2, %s15
      // Predicated region
      $region57: #{tpu_custom_call.1} parent=5 // pred_check
        %p713 = pneg %p712
      $region58: #{tpu_custom_call.1} parent=5 // pred_check_branch
        %715 = sbr.rel (%p713) target = $region60
      $region59: #{tpu_custom_call.1} parent=5 // pred_region
        %s716 = ssub.s32 %s15, 2
        // Predicated region
        $region61: #{tpu_custom_call.1} parent=59 // pred_check
          %p717 = pneg %p154
        $region62: #{tpu_custom_call.1} parent=59 // pred_check_branch
          %719 = sbr.rel (%p717) target = $region64
        $region63: #{tpu_custom_call.1} parent=59 // pred_region
          %p720 = scmp.lt.s32.totalorder %s21, 3
          %s721 = scalar_select %p720, %s21, 3
          %s722 = smul.addr %s721, 4
          %s723 = smul.addr %s722, 8
          %s724 = scalar_lea.vmem %s5, %s723
        $region64: #{tpu_custom_call.1} parent=59 // pred_fallthru
          _
      $region60: #{tpu_custom_call.1} parent=5 // pred_fallthru
        _
    $region6: #{tpu_custom_call.1} parent=1 // loop_footer
      %s19 = sadd.s32 1, %s15
    $region7: #{tpu_custom_call.1} parent=1 // loop_footer_branch
      %14 = sbr.rel target = $region3
    $region8: #{tpu_custom_call.1} parent=1 // loop_exit
      _
    %725 = vsyncpa [#allocation3], 1
    %s726 = scalar_lea.sflag [#allocation3], 1
    %727 = vsyncpa %s726, 1
    %728 = vsyncpa [#allocation5], 1

</llo_original>
